<compile_context>
chip_gen: v6e
topology: v6e:2x2x1
jax: 0.10.0
libtpu: 0.0.40
codegen_flags: <defaults>
</compile_context>

<pallas_src>
import math

import jax
import jax.numpy as jnp
from jax import lax
from jax.experimental import pallas as pl
from jax.experimental.pallas import tpu as pltpu

VMEM_LIMIT = 32 * 1024 * 1024


# ----------------------------------------------------------------------------
# Tile selection (blocks must be (8,128)-aligned or equal to the full dim)
# ----------------------------------------------------------------------------
def _pick_seq_tile(L, max_tile=256):
    if L <= max_tile:
        return L
    for t in range(max_tile, 7, -1):
        if L % t == 0 and t % 8 == 0:
            return t
    return L


def _pick_label_tile(Y, max_tile=512):
    if Y <= max_tile:
        return Y
    # Y-tiles appear as the lane dim of (1,1,ty) blocks -> need 128-multiples.
    for t in range(max_tile, 127, -1):
        if Y % t == 0 and t % 128 == 0:
            return t
    return Y


# ----------------------------------------------------------------------------
# Kernel 1: z = tanh(x @ W_t + b)            grid = (B, L // TL), both parallel
# ----------------------------------------------------------------------------
def proj_kernel(x_ref, w_ref, b_ref, z_ref):
    x = x_ref[0]                                                    # [TL, H] bf16
    z = jnp.dot(x, w_ref[...], preferred_element_type=jnp.float32) + b_ref[...]
    z_ref[0] = jnp.tanh(z).astype(z_ref.dtype)                      # store bf16


def project(x_bf, w_t, w_b, *, tl):
    B, L, H = x_bf.shape
    A = w_t.shape[1]
    return pl.pallas_call(
        proj_kernel,
        out_shape=jax.ShapeDtypeStruct((B, L, A), jnp.bfloat16),
        grid=(B, L // tl),
        in_specs=[pl.BlockSpec((1, tl, H), lambda b, l: (b, l, 0)),
                  pl.BlockSpec((H, A), lambda b, l: (0, 0)),
                  pl.BlockSpec((1, A), lambda b, l: (0, 0))],
        out_specs=pl.BlockSpec((1, tl, A), lambda b, l: (b, l, 0)),
        compiler_params=pltpu.CompilerParams(
            dimension_semantics=("parallel", "parallel"),
            vmem_limit_bytes=VMEM_LIMIT),
    )(x_bf, w_t, w_b)


# ----------------------------------------------------------------------------
# Kernel 2: label attention + per-label BCE   grid = (B, Y // TY), both parallel
# ----------------------------------------------------------------------------
def label_attn_kernel(z_ref, x_ref, u_ref, fw_ref, fb_ref, tgt_ref,
                      y_ref, alpha_ref, m_ref, bce_ref):
    z = z_ref[0]                                                    # [L, A]  bf16
    x = x_ref[0]                                                    # [L, H]  bf16
    u = u_ref[...]                                                  # [TY, A] bf16

    # scores = U_w @ z^T as a contraction over attn_dim (last axis of both
    # operands): no explicit .T / XLU transpose before the MXU.
    s = lax.dot_general(u, z, (((1,), (1,)), ((), ())),
                        preferred_element_type=jnp.float32)         # [TY, L] f32

    # softmax over L (f32), denominator reciprocal on the EUP.
    s = s - jnp.max(s, axis=-1, keepdims=True)
    e = jnp.exp(s)
    inv = pl.reciprocal(jnp.sum(e, axis=-1, keepdims=True), approx=True)
    alpha = e * inv                                                 # [TY, L] f32

    m = jnp.dot(alpha.astype(jnp.bfloat16), x,
                preferred_element_type=jnp.float32)                 # [TY, H] f32

    y = jnp.sum(fw_ref[...] * m, axis=-1)[None, :] + fb_ref[...]    # [1, TY] f32

    alpha_ref[0] = alpha
    m_ref[0] = m
    y_ref[0] = y

    # numerically-stable BCE-with-logits per label; mean reduction in wrapper.
    t = tgt_ref[0]                                                  # [1, TY]
    bce_ref[0] = jnp.maximum(y, 0.0) - y * t + jnp.log1p(jnp.exp(-jnp.abs(y)))


def label_attention(z, x_bf, u_w, final_w, final_b, tgt3, *, ty):
    B, L, A = z.shape
    H = x_bf.shape[2]
    Y = u_w.shape[0]
    out_shapes = (
        jax.ShapeDtypeStruct((B, 1, Y), jnp.float32),   # y (logits)
        jax.ShapeDtypeStruct((B, Y, L), jnp.float32),   # alpha
        jax.ShapeDtypeStruct((B, Y, H), jnp.float32),   # m
        jax.ShapeDtypeStruct((B, 1, Y), jnp.float32),   # per-label BCE terms
    )
    out_specs = (
        pl.BlockSpec((1, 1, ty), lambda b, t: (b, 0, t)),
        pl.BlockSpec((1, ty, L), lambda b, t: (b, t, 0)),
        pl.BlockSpec((1, ty, H), lambda b, t: (b, t, 0)),
        pl.BlockSpec((1, 1, ty), lambda b, t: (b, 0, t)),
    )
    in_specs = [
        pl.BlockSpec((1, L, A), lambda b, t: (b, 0, 0)),   # z
        pl.BlockSpec((1, L, H), lambda b, t: (b, 0, 0)),   # x (bf16)
        pl.BlockSpec((ty, A), lambda b, t: (t, 0)),        # U weight tile
        pl.BlockSpec((ty, H), lambda b, t: (t, 0)),        # final weight tile
        pl.BlockSpec((1, ty), lambda b, t: (0, t)),        # final bias tile
        pl.BlockSpec((1, 1, ty), lambda b, t: (b, 0, t)),  # target tile
    ]
    return pl.pallas_call(
        label_attn_kernel,
        out_shape=out_shapes,
        grid=(B, Y // ty),
        in_specs=in_specs,
        out_specs=out_specs,
        compiler_params=pltpu.CompilerParams(
            dimension_semantics=("parallel", "parallel"),
            vmem_limit_bytes=VMEM_LIMIT),
    )(z, x_bf, u_w, final_w, final_b, tgt3)


# ----------------------------------------------------------------------------
# Parameter init (mirrors nn.Linear defaults + xavier_uniform on the weights)
# ----------------------------------------------------------------------------
def init_params(key, input_size, attn_dim, Y):
    kW, kWb, kU, kF, kFb = jax.random.split(key, 5)

    def xavier(k, shape):
        fan_out, fan_in = shape
        lim = math.sqrt(6.0 / (fan_in + fan_out))
        return jax.random.uniform(k, shape, jnp.float32, -lim, lim)

    w = xavier(kW, (attn_dim, input_size))     # W.weight  [A, H]
    u = xavier(kU, (Y, attn_dim))              # U.weight  [Y, A]  (U.bias unused)
    f = xavier(kF, (Y, input_size))            # final.weight [Y, H]
    bl = 1.0 / math.sqrt(input_size)
    return {
        "w_t": jnp.asarray(w.T, jnp.bfloat16),                     # [H, A] pre-transposed (MXU)
        "w_b": jax.random.uniform(kWb, (1, attn_dim), jnp.float32, -bl, bl),
        "u_w": jnp.asarray(u, jnp.bfloat16),                       # [Y, A] (MXU)
        "final_w": f,                                              # [Y, H] f32 (VPU only)
        "final_b": jax.random.uniform(kFb, (1, Y), jnp.float32, -bl, bl),
    }


# ----------------------------------------------------------------------------
# Full forward (matches LAATDecoder.forward)
# ----------------------------------------------------------------------------
def laat_decoder_forward(params, x, target, text_inputs=None):
    # TODO(synk): text_inputs is accepted for signature parity but is unused by
    # LAATDecoder.forward in the reference module.
    B, L, H = x.shape
    A = params["w_t"].shape[1]
    Y = params["u_w"].shape[0]
    tl = _pick_seq_tile(L)
    ty = _pick_label_tile(Y)

    x_bf = x.astype(jnp.bfloat16)              # single cast; all uses are MXU operands
    z = project(x_bf, params["w_t"], params["w_b"], tl=tl)
    tgt3 = target.astype(jnp.float32).reshape(B, 1, Y)
    y3, alpha, m, bce = label_attention(z, x_bf, params["u_w"],
                                        params["final_w"], params["final_b"],
                                        tgt3, ty=ty)
    y = y3.reshape(B, Y)
    loss = jnp.sum(bce) / (B * Y)              # BCEWithLogitsLoss mean reduction
    return y, loss, alpha, m


# ----------------------------------------------------------------------------
if __name__ == "__main__":
    B, L = 2, 16            # batch, sequence
    H, A, Y = 64, 32, 8     # input_size, attn_dim, num labels

    key = jax.random.PRNGKey(0)
    k_param, k_x, k_tgt = jax.random.split(key, 3)

    params = init_params(k_param, input_size=H, attn_dim=A, Y=Y)
    x = jax.random.normal(k_x, (B, L, H), jnp.float32)
    target = (jax.random.uniform(k_tgt, (B, Y)) > 0.5).astype(jnp.float32)

    y, loss, alpha, m = laat_decoder_forward(params, x, target, text_inputs=None)
    jax.block_until_ready((y, loss, alpha, m))

    assert y.shape == (B, Y)
    assert alpha.shape == (B, Y, L)
    assert m.shape == (B, Y, H)
    assert loss.shape == ()
    assert bool(jnp.isfinite(loss))
    # softmax rows over L should sum to ~1 (approx reciprocal => loose tol)
    assert bool(jnp.all(jnp.abs(jnp.sum(alpha, axis=-1) - 1.0) < 1e-2))
    print("KERNEL_OK")
</pallas_src>

<mosaic_0001>
module attributes {stable_mosaic.version = 11 : i64} {
  func.func @proj_kernel(%arg0: i32, %arg1: i32, %arg2: memref<1x16x64xbf16, #tpu.memory_space<vmem>>, %arg3: memref<64x32xbf16, #tpu.memory_space<vmem>>, %arg4: memref<1x32xf32, #tpu.memory_space<vmem>>, %arg5: memref<1x16x32xbf16, #tpu.memory_space<vmem>>) attributes {dimension_semantics = [#tpu.dimension_semantics<parallel>, #tpu.dimension_semantics<parallel>], iteration_bounds = array<i64: 2, 1>, scalar_prefetch = 0 : i64, scratch_operands = 0 : i64, tpu.core_type = #tpu.core_type<tc>, window_params = [{transform_indices = @transform_0, window_bounds = array<i64: 1, 16, 64>}, {pipeline_mode = #tpu.pipeline_mode<synchronous>, transform_indices = @transform_1, window_bounds = array<i64: 64, 32>}, {pipeline_mode = #tpu.pipeline_mode<synchronous>, transform_indices = @transform_2, window_bounds = array<i64: 1, 32>}, {transform_indices = @transform_3, window_bounds = array<i64: 1, 16, 32>}]} {
    %c0 = arith.constant 0 : index
    %c0_0 = arith.constant 0 : index
    %c0_1 = arith.constant 0 : index
    %0 = vector.load %arg2[%c0, %c0_0, %c0_1] : memref<1x16x64xbf16, #tpu.memory_space<vmem>>, vector<1x16x64xbf16>
    %1 = vector.shape_cast %0 : vector<1x16x64xbf16> to vector<16x64xbf16>
    %c0_2 = arith.constant 0 : index
    %c0_3 = arith.constant 0 : index
    %2 = vector.load %arg3[%c0_2, %c0_3] : memref<64x32xbf16, #tpu.memory_space<vmem>>, vector<64x32xbf16>
    %cst = arith.constant dense<0.000000e+00> : vector<16x32xf32>
    %3 = tpu.matmul %1, %2, %cst {dimension_numbers = #tpu.dot_dimension_numbers<[1], [0], [0], [1], [0, 0, 1, 1], [], []>} : vector<16x64xbf16>, vector<64x32xbf16>, vector<16x32xf32> -> vector<16x32xf32>
    %c0_4 = arith.constant 0 : index
    %c0_5 = arith.constant 0 : index
    %4 = vector.load %arg4[%c0_4, %c0_5] : memref<1x32xf32, #tpu.memory_space<vmem>>, vector<1x32xf32>
    %5 = vector.broadcast %4 : vector<1x32xf32> to vector<16x32xf32>
    %6 = arith.addf %3, %5 : vector<16x32xf32>
    %7 = math.tanh %6 : vector<16x32xf32>
    %8 = arith.truncf %7 : vector<16x32xf32> to vector<16x32xbf16>
    %c0_6 = arith.constant 0 : index
    %c0_7 = arith.constant 0 : index
    %c0_8 = arith.constant 0 : index
    %9 = vector.load %arg5[%c0_6, %c0_7, %c0_8] : memref<1x16x32xbf16, #tpu.memory_space<vmem>>, vector<1x16x32xbf16>
    %10 = vector.shape_cast %9 : vector<1x16x32xbf16> to vector<16x32xbf16>
    %11 = vector.shape_cast %8 : vector<16x32xbf16> to vector<1x16x32xbf16>
    tpu.vector_store %arg5[%c0_6, %c0_7, %c0_8], %11 {strides = array<i32>} : memref<1x16x32xbf16, #tpu.memory_space<vmem>>, vector<1x16x32xbf16>,
    return
  }
  func.func @transform_0(%arg0: i32, %arg1: i32) -> (i32, i32, i32) {
    %c0_i32 = arith.constant 0 : i32
    %c0_i32_0 = arith.constant 0 : i32
    return %arg0, %arg1, %c0_i32 : i32, i32, i32
  }
  func.func @transform_1(%arg0: i32, %arg1: i32) -> (i32, i32) {
    %c0_i32 = arith.constant 0 : i32
    %c0_i32_0 = arith.constant 0 : i32
    %c0_i32_1 = arith.constant 0 : i32
    return %c0_i32, %c0_i32_0 : i32, i32
  }
  func.func @transform_2(%arg0: i32, %arg1: i32) -> (i32, i32) {
    %c0_i32 = arith.constant 0 : i32
    %c0_i32_0 = arith.constant 0 : i32
    %c0_i32_1 = arith.constant 0 : i32
    return %c0_i32, %c0_i32_0 : i32, i32
  }
  func.func @transform_3(%arg0: i32, %arg1: i32) -> (i32, i32, i32) {
    %c0_i32 = arith.constant 0 : i32
    %c0_i32_0 = arith.constant 0 : i32
    return %arg0, %arg1, %c0_i32 : i32, i32, i32
  }
}

</mosaic_0001>

<llo_original>
// kernel: tpu_custom_call.1
$region0: #{tpu_custom_call.1}
  #allocation0 [shape = 'u32[]', space=smem, size = 0x4, offset = 0x4, fixed_abs, tag = 'smem constant byte address 0x4 - core index']
  #allocation1 [shape = 'u32[144,128]{1,0:T(1,128)}', space=vmem, size = 0x12000, scoped, tag = 'internal scratch']
  %s0 = inlined_call_operand.vmem [shape: bf16[2,16,64], index: 0, kind: input, shape index: {}]
  %s1 = inlined_call_operand.vmem [shape: bf16[64,32], index: 1, kind: input, shape index: {}]
  %s2 = inlined_call_operand.vmem [shape: f32[1,32], index: 2, kind: input, shape index: {}]
  %s3 = inlined_call_operand.hbm [shape: bf16[2,16,32], index: 3, kind: output, shape index: {}]
  %s4 = sld [smem:[#allocation0]]
  $region45: #{tpu_custom_call.1} parent=0
    _
  %s6 = ssub.s32 1, %s4
  %s7 = scalar_select 0, %s6, %s4
  $region1: #{tpu_custom_call.1} parent=0
    #allocation2 [shape = 'u8[8192]{0}', space=vmem, size = 0x2000, scoped, tag = 'output window, operand 0']
    #allocation3 [shape = 's32[2]{0}', space=sflag, size = 0x8, scoped, tag = 'scoped memory for tpu_custom_call.1']
    %8 = vsyncpa [#allocation3], 0
    %s9 = scalar_lea.sflag [#allocation3], 1
    %10 = vsyncpa %s9, 0
    loop: start=0, step=1, limit=4
    $region2: #{tpu_custom_call.1} parent=1 // loop_pre_header
      _
    $region3: #{tpu_custom_call.1} parent=1 // loop_header
      %s12 = sphi 0, %s16
      %p13 = scmp.ge.s32.totalorder %s12, 4
      %s19 = sphi 0, %s31
      %s20 = sphi 0, %s27
      %s21 = sphi 0, %s19
      %s22 = sphi 0, %s20
      %s23 = sphi 0, %s21
      %s24 = sphi 0, %s22
      %s36 = sphi 0, %s38
      %s39 = sphi 0, %s36
      %s40 = sphi 0, %s39
      %s56 = sphi 0, %s40
      %s60 = sphi 0, %s60
      %s62 = sphi 0, %s60
      %s63 = sphi 0, %s62
      %s77 = sphi 0, %s63
      %s81 = sphi 0, %s81
      %s83 = sphi 0, %s81
      %s84 = sphi 0, %s83
      %s98 = sphi 0, %s84
      %s106 = sphi 0, %s108
      %s109 = sphi 0, %s106
      %s110 = sphi 0, %s109
      %s126 = sphi 0, %s110
    $region4: #{tpu_custom_call.1} parent=1 // loop_header_branch
      %15 = sbr.rel (%p13) target = $region8
    $region5: #{tpu_custom_call.1} parent=1 // loop_body
      %s17 = ssub.s32 %s12, 1
      %s18 = ssub.s32 %s12, 2
      %s25 = sadd.s32 1, %s20
      %p26 = scmp.ge.s32.totalorder %s25, 1
      %s27 = scalar_select %p26, 0, %s25
      %s28 = sadd.s32 1, %s19
      %s29 = scalar_select %p26, %s28, %s19
      %p30 = scmp.ge.s32.totalorder %s29, 2
      %s31 = scalar_select %p30, 0, %s29
      %s32 = ssub.s32 %s19, %s31
      %s33 = ssub.s32 %s20, %s27
      %s34 = sor.u32 %s32, %s33
      %p35 = scmp.eq.s32.totalorder %s34, 0
      %s37 = sadd.s32 %s36, 1
      %s38 = scalar_select %p35, %s36, %s37
      %p41 = pneg %p35
      %p42 = scmp.eq.s32.totalorder %s12, 1
      %p43 = por %p41, %p42
      %p44 = scmp.ne.s32.totalorder %s36, %s39
      %p45 = scmp.eq.s32.totalorder %s12, 0
      %p46 = por %p44, %p45
      %p47 = scmp.ne.s32.totalorder %s36, %s39
      %p48 = scmp.eq.s32.totalorder %s17, 1
      %p49 = por %p47, %p48
      %p50 = scmp.ne.s32.totalorder %s39, %s40
      %p51 = scmp.eq.s32.totalorder %s17, 0
      %p52 = por %p50, %p51
      %p53 = scmp.ne.s32.totalorder %s39, %s40
      %p54 = scmp.eq.s32.totalorder %s18, 1
      %p55 = por %p53, %p54
      %p57 = scmp.ne.s32.totalorder %s40, %s56
      %p58 = scmp.eq.s32.totalorder %s18, 0
      %p59 = por %p57, %p58
      %s61 = sadd.s32 %s60, 1
      %p64 = scmp.eq.s32.totalorder %s12, 1
      %p65 = scmp.ne.s32.totalorder %s60, %s62
      %p66 = scmp.eq.s32.totalorder %s12, 0
      %p67 = por %p65, %p66
      %p68 = scmp.ne.s32.totalorder %s60, %s62
      %p69 = scmp.eq.s32.totalorder %s17, 1
      %p70 = por %p68, %p69
      %p71 = scmp.ne.s32.totalorder %s62, %s63
      %p72 = scmp.eq.s32.totalorder %s17, 0
      %p73 = por %p71, %p72
      %p74 = scmp.ne.s32.totalorder %s62, %s63
      %p75 = scmp.eq.s32.totalorder %s18, 1
      %p76 = por %p74, %p75
      %p78 = scmp.ne.s32.totalorder %s63, %s77
      %p79 = scmp.eq.s32.totalorder %s18, 0
      %p80 = por %p78, %p79
      %s82 = sadd.s32 %s81, 1
      %p85 = scmp.eq.s32.totalorder %s12, 1
      %p86 = scmp.ne.s32.totalorder %s81, %s83
      %p87 = scmp.eq.s32.totalorder %s12, 0
      %p88 = por %p86, %p87
      %p89 = scmp.ne.s32.totalorder %s81, %s83
      %p90 = scmp.eq.s32.totalorder %s17, 1
      %p91 = por %p89, %p90
      %p92 = scmp.ne.s32.totalorder %s83, %s84
      %p93 = scmp.eq.s32.totalorder %s17, 0
      %p94 = por %p92, %p93
      %p95 = scmp.ne.s32.totalorder %s83, %s84
      %p96 = scmp.eq.s32.totalorder %s18, 1
      %p97 = por %p95, %p96
      %p99 = scmp.ne.s32.totalorder %s84, %s98
      %p100 = scmp.eq.s32.totalorder %s18, 0
      %p101 = por %p99, %p100
      %s102 = ssub.s32 %s19, %s31
      %s103 = ssub.s32 %s20, %s27
      %s104 = sor.u32 %s102, %s103
      %p105 = scmp.eq.s32.totalorder %s104, 0
      %s107 = sadd.s32 %s106, 1
      %s108 = scalar_select %p105, %s106, %s107
      %p111 = pneg %p105
      %p112 = scmp.eq.s32.totalorder %s12, 1
      %p113 = por %p111, %p112
      %p114 = scmp.ne.s32.totalorder %s106, %s109
      %p115 = scmp.eq.s32.totalorder %s12, 0
      %p116 = por %p114, %p115
      %p117 = scmp.ne.s32.totalorder %s106, %s109
      %p118 = scmp.eq.s32.totalorder %s17, 1
      %p119 = por %p117, %p118
      %p120 = scmp.ne.s32.totalorder %s109, %s110
      %p121 = scmp.eq.s32.totalorder %s17, 0
      %p122 = por %p120, %p121
      %p123 = scmp.ne.s32.totalorder %s109, %s110
      %p124 = scmp.eq.s32.totalorder %s18, 1
      %p125 = por %p123, %p124
      %p127 = scmp.ne.s32.totalorder %s110, %s126
      %p128 = scmp.eq.s32.totalorder %s18, 0
      %p129 = por %p127, %p128
      %p130 = scmp.le.s32.totalorder 1, %s12
      %p131 = scmp.lt.s32.totalorder %s12, 3
      %p132 = pnand %p130, %p131
      %p133 = pneg %p132
      // Predicated region
      $region9: #{tpu_custom_call.1} parent=5 // pred_check
        _
      $region10: #{tpu_custom_call.1} parent=5 // pred_check_branch
        %135 = sbr.rel (%p132) target = $region12
      $region11: #{tpu_custom_call.1} parent=5 // pred_region
        %s136 = ssub.s32 %s12, 1
        // Predicated region
        $region13: #{tpu_custom_call.1} parent=11 // pred_check
          %p137 = pneg %p73
        $region14: #{tpu_custom_call.1} parent=11 // pred_check_branch
          %139 = sbr.rel (%p137) target = $region16
        $region15: #{tpu_custom_call.1} parent=11 // pred_region
          _
        $region16: #{tpu_custom_call.1} parent=11 // pred_fallthru
          _
        // Predicated region
        $region17: #{tpu_custom_call.1} parent=11 // pred_check
          %p140 = pneg %p94
        $region18: #{tpu_custom_call.1} parent=11 // pred_check_branch
          %142 = sbr.rel (%p140) target = $region20
        $region19: #{tpu_custom_call.1} parent=11 // pred_region
          _
        $region20: #{tpu_custom_call.1} parent=11 // pred_fallthru
          _
      $region12: #{tpu_custom_call.1} parent=5 // pred_fallthru
        _
      %p143 = scmp.lt.s32.totalorder %s12, 2
      // Predicated region
      $region21: #{tpu_custom_call.1} parent=5 // pred_check
        %p144 = pneg %p143
      $region22: #{tpu_custom_call.1} parent=5 // pred_check_branch
        %146 = sbr.rel (%p144) target = $region24
      $region23: #{tpu_custom_call.1} parent=5 // pred_region
        // Predicated region
        $region25: #{tpu_custom_call.1} parent=23 // pred_check
          %p147 = pneg %p46
        $region26: #{tpu_custom_call.1} parent=23 // pred_check_branch
          %149 = sbr.rel (%p147) target = $region28
        $region27: #{tpu_custom_call.1} parent=23 // pred_region
          %s150 = smul.u32 2, %s20
          %p151 = scmp.lt.s32.totalorder %s19, 1
          %s152 = scalar_select %p151, %s19, 1
          %p153 = scmp.lt.s32.totalorder %s150, 1
          %s154 = scalar_select %p153, %s150, 1
          %s155 = smul.addr %s152, 2
          %s156 = sadd.s32 %s154, %s155
          %s157 = smul.addr %s156, 4
          %s158 = scalar_lea.vmem %s0, %s157
          %s159 = smul.u32 2, %s20
        $region28: #{tpu_custom_call.1} parent=23 // pred_fallthru
          _
      $region24: #{tpu_custom_call.1} parent=5 // pred_fallthru
        _
      %p160 = scmp.le.s32.totalorder 1, %s12
      %p161 = scmp.lt.s32.totalorder %s12, 3
      %p162 = pnand %p160, %p161
      %p163 = pneg %p162
      // Predicated region
      $region29: #{tpu_custom_call.1} parent=5 // pred_check
        _
      $region30: #{tpu_custom_call.1} parent=5 // pred_check_branch
        %165 = sbr.rel (%p162) target = $region32
      $region31: #{tpu_custom_call.1} parent=5 // pred_region
        %s166 = ssub.s32 %s12, 1
        %s167 = smul.u32 2, %s22
        %p168 = scmp.lt.s32.totalorder %s21, 1
        %s169 = scalar_select %p168, %s21, 1
        %p170 = scmp.lt.s32.totalorder %s167, 1
        %s171 = scalar_select %p170, %s167, 1
        %s172 = smul.addr %s169, 2
        %s173 = sadd.s32 %s171, %s172
        %s174 = smul.addr %s173, 4
        %s175 = scalar_lea.vmem %s0, %s174
        %p176 = pneg %p52
        %p177 = pneg %p49
        %p178 = pneg %p73
        %p179 = pneg %p70
        %p180 = pneg %p94
        %p181 = pneg %p91
        %p182 = pneg %p122
        %p183 = pneg %p119
        %s184 = sand.u32 %s109, 1
        %s185 = scalar_lea.sflag [#allocation3], %s184
        %s186 = sand.u32 %s109, 1
        %s187 = smul.addr %s186, 8
        %s188 = scalar_lea.vmem [#allocation2], %s187
        %s189 = smul.u32 2, %s22
        %p190 = scmp.lt.s32.totalorder %s21, 1
        %s191 = scalar_select %p190, %s21, 1
        %p192 = scmp.lt.s32.totalorder %s189, 1
        %s193 = scalar_select %p192, %s189, 1
        %s194 = smul.addr %s191, 2
        %s195 = sadd.s32 %s193, %s194
        %s196 = smul.addr %s195, 4
        %s197 = scalar_lea.vmem %s0, %s196
        %s198 = smul.u32 2, %s22
        %s199 = smul.u32 2, %s22
        %v201 = vld [vmem:[%s197] sm:$0xf]
        %v202 = vld [vmem:[%s197 + $0x4] sm:$0xf]
        %v203 = vld [vmem:[%s1] sm:$0xf]
        %v204 = vld [vmem:[%s1 + $0x4] sm:$0xf]
        %v205 = vld [vmem:[%s1 + $0x8] sm:$0xf]
        %v206 = vld [vmem:[%s1 + $0xc] sm:$0xf]
        %v207 = vld [vmem:[%s1 + $0x10] sm:$0xf]
        %v208 = vld [vmem:[%s1 + $0x14] sm:$0xf]
        %v209 = vld [vmem:[%s1 + $0x18] sm:$0xf]
        %v210 = vld [vmem:[%s1 + $0x1c] sm:$0xf]
        %v211 = vld [vmem:[%s2] sm:$0x1]
        %v213 = vlaneseq
        %v214 = vshrl.u32 %v213, 7
        %v215 = vsub.s32 0, %v214
        %v216 = vrot.slane %v211, %v215
        %v220 = vunpack.c.l.b16 %v201
        %v221 = vunpack.c.l.b16 %v202
        %v222 = vpack.c.b16 %v221, %v220
        %v231 = vunpack.c.l.b16 %v203
        %v232 = vunpack.c.l.b16 %v204
        %v233 = vunpack.c.l.b16 %v205
        %v234 = vunpack.c.l.b16 %v206
        %v235 = vunpack.c.l.b16 %v207
        %v236 = vunpack.c.l.b16 %v208
        %v237 = vunpack.c.l.b16 %v209
        %v238 = vunpack.c.l.b16 %v210
        %v239 = vpack.c.b16 %v232, %v231
        %v240 = vpack.c.b16 %v234, %v233
        %v241 = vpack.c.b16 %v236, %v235
        %v242 = vpack.c.b16 %v238, %v237
        %vm247 = vcmask 523264
        %v249 = vsel %vm247, %v222, 0
        %251 = vmatprep.subr.bf16.mxu0 0
        %252 = vmatpush1.bf16.msra.mxu0 0
        %253 = vmatprep.subr.bf16.mxu0 0
        %254 = vmatpush1.bf16.msra.mxu0 0
        %255 = vmatprep.subr.bf16.mxu0 0
        %256 = vmatpush1.bf16.msra.mxu0 0
        %257 = vmatprep.subr.bf16.mxu0 0
        %258 = vmatpush1.bf16.msra.mxu0 0
        %259 = vmatprep.subr.bf16.mxu0 0
        %260 = vmatpush1.bf16.msra.mxu0 %v242
        %261 = vmatprep.subr.bf16.mxu0 0
        %262 = vmatpush1.bf16.msra.mxu0 %v241
        %263 = vmatprep.subr.bf16.mxu0 0
        %264 = vmatpush1.bf16.msra.mxu0 %v240
        %265 = vmatprep.subr.bf16.mxu0 0
        %266 = vmatpush1.bf16.msra.mxu0 %v239
        %267 = vmatprep.subr.bf16.mxu0 0
        %268 = vmatpush2.bf16.msra.mxu0 0
        %269 = vmatprep.subr.bf16.mxu0 0
        %270 = vmatpush2.bf16.msra.mxu0 0
        %271 = vmatprep.subr.bf16.mxu0 0
        %272 = vmatpush2.bf16.msra.mxu0 0
        %273 = vmatprep.subr.bf16.mxu0 0
        %274 = vmatpush2.bf16.msra.mxu0 0
        %275 = vmatprep.subr.bf16.mxu0 0
        %276 = vmatpush2.bf16.msra.mxu0 0
        %277 = vmatprep.subr.bf16.mxu0 0
        %278 = vmatpush2.bf16.msra.mxu0 0
        %279 = vmatprep.subr.bf16.mxu0 0
        %280 = vmatpush2.bf16.msra.mxu0 0
        %281 = vmatprep.subr.bf16.mxu0 0
        %282 = vmatpush2.bf16.msra.mxu0 0
        %283 = vmatprep.mubr.bf16.mxu0 0
        %284 = vmatmul.mubr.bf16.gmra.mxu0 %v249
        %v285 = vpop.f32.mrf.mxu0
        %v286 = vadd.f32 %v216, %v285
        %v287 = vpop.f32.mrf.mxu0
        %v288 = vpop.f32.mrf.mxu0
        %v289 = vadd.f32 %v216, %v288
        %v290 = vpop.f32.mrf.mxu0
        %291 = vdwg.mxu0
        %v292 = vtanh.pop %v286
        %v293 = vtanh.pop %v289
        %v294 = vpack.c.bf16 %v293, %v292
        %v296 = vunpack.c.l.b16 %v294
        %v297 = vunpack.c.h.b16 %v294
        %v298 = vpack.c.b16 %v296, %v296
        %v299 = vpack.c.b16 %v297, %v297
        %vm302 = vcmask 257024
        %303 = vst.msk [vmem:[%s188] sm:$0xf] %vm302, %v298
        %304 = vst.msk [vmem:[%s188 + $0x4] sm:$0xf] %vm302, %v299
        %s305 = sand.u32 %s109, 1
        %s306 = scalar_lea.sflag [#allocation3], %s305
        %s307 = sand.u32 %s109, 1
        %s308 = smul.addr %s307, 8
        %s309 = scalar_lea.vmem [#allocation2], %s308
        // Predicated region
        $region33: #{tpu_custom_call.1} parent=31 // pred_check
          %p310 = pneg %p119
        $region34: #{tpu_custom_call.1} parent=31 // pred_check_branch
          %312 = sbr.rel (%p310) target = $region36
        $region35: #{tpu_custom_call.1} parent=31 // pred_region
          %s313 = smul.u32 2, %s22
          %s315 = ssub.s32 128, 128
          %316 = vsyncadd %s306, %s315
          %s317 = smul.addr %s21, 2
          %s318 = sadd.s32 %s313, %s317
          %s319 = smul.addr %s318, 64
          %s320 = scalar_lea.hbm %s3, %s319
          %s321 = sshll.u32 %s309, 4
          %s322 = int_to_ptr.vmem [resolvable:$true] %s321
          %327 = dma.vmem_to_hbm [thread:$0]  %s322, 128, %s320, %s306, 64, 64, 4
        $region36: #{tpu_custom_call.1} parent=31 // pred_fallthru
          _
      $region32: #{tpu_custom_call.1} parent=5 // pred_fallthru
        _
      %p328 = scmp.le.s32.totalorder 2, %s12
      // Predicated region
      $region37: #{tpu_custom_call.1} parent=5 // pred_check
        %p329 = pneg %p328
      $region38: #{tpu_custom_call.1} parent=5 // pred_check_branch
        %331 = sbr.rel (%p329) target = $region40
      $region39: #{tpu_custom_call.1} parent=5 // pred_region
        %s332 = ssub.s32 %s12, 2
        // Predicated region
        $region41: #{tpu_custom_call.1} parent=39 // pred_check
          %p333 = pneg %p125
        $region42: #{tpu_custom_call.1} parent=39 // pred_check_branch
          %335 = sbr.rel (%p333) target = $region44
        $region43: #{tpu_custom_call.1} parent=39 // pred_region
          %s336 = sand.u32 %s110, 1
          %s337 = scalar_lea.sflag [#allocation3], %s336
          %s338 = sand.u32 %s110, 1
          %s339 = smul.addr %s338, 8
          %s340 = scalar_lea.vmem [#allocation2], %s339
          %341 = dma.done %s337, 128
        $region44: #{tpu_custom_call.1} parent=39 // pred_fallthru
          _
      $region40: #{tpu_custom_call.1} parent=5 // pred_fallthru
        _
    $region6: #{tpu_custom_call.1} parent=1 // loop_footer
      %s16 = sadd.s32 1, %s12
    $region7: #{tpu_custom_call.1} parent=1 // loop_footer_branch
      %11 = sbr.rel target = $region3
    $region8: #{tpu_custom_call.1} parent=1 // loop_exit
      _
    %342 = vsyncpa [#allocation3], 1
    %s343 = scalar_lea.sflag [#allocation3], 1
    %344 = vsyncpa %s343, 1

</llo_original>
